<compile_context>
chip_gen: v7x
topology: tpu7x:2x2x1
jax: 0.10.0
libtpu: 0.0.40
codegen_flags: <defaults>
</compile_context>

<pallas_src>
import jax
import jax.numpy as jnp
from jax.experimental import pallas as pl
from jax.experimental.pallas import tpu as pltpu


# ------------------------------------------------------------------ tiling ---

_MAX_DMA_CHUNKS = 4                 # 2-4 in-flight DMAs saturate HBM BW
_MIN_CHUNK_BYTES = 4 * 1024 * 1024  # don't bother splitting below ~4 MiB/chunk


def _chunk_rows(rows: int, bytes_per_row: int):
    """Split `rows` into <=_MAX_DMA_CHUNKS contiguous (start, size) chunks."""
    total = rows * bytes_per_row
    n = 1
    if total > 0:
        n = min(_MAX_DMA_CHUNKS, max(1, total // _MIN_CHUNK_BYTES), rows)
    n = max(int(n), 1)
    base, rem = divmod(rows, n)
    bounds = []
    start = 0
    for i in range(n):
        size = base + (1 if i < rem else 0)
        if size > 0:
            bounds.append((start, size))
            start += size
    return tuple(bounds)


# ------------------------------------------------------------------ kernel ---

def _build_hbm_copy_kernel(chunk_bounds):
    """Kernel that issues one HBM->HBM DMA per (row_start, row_count) chunk."""

    def kernel(src_hbm, dst_hbm, sems):
        copies = []
        for idx, (start, size) in enumerate(chunk_bounds):
            if len(chunk_bounds) == 1:
                # Single chunk == whole array: copy the full refs directly.
                src, dst = src_hbm, dst_hbm
            else:
                src = src_hbm.at[pl.ds(start, size), :]
                dst = dst_hbm.at[pl.ds(start, size), :]
            cp = pltpu.make_async_copy(src, dst, sems.at[idx])
            cp.start()
            copies.append(cp)
        # All chunks in flight; now drain.
        for cp in copies:
            cp.wait()

    return kernel


# ----------------------------------------------------------------- forward ---

@jax.jit
def model_base_rep_projection_forward(encoder):
    """Identity 'projection' of the encoder via direct HBM->HBM Pallas DMAs.

    Args:
        encoder: [..., encoder_size]
    Returns:
        [..., encoder_size]  (same values, same dtype)
    """
    leading = encoder.shape[:-1]
    e = int(encoder.shape[-1])
    rows = 1
    for d in leading:
        rows *= int(d)

    if rows == 0 or e == 0:
        return encoder  # degenerate: nothing to move

    itemsize = jnp.dtype(encoder.dtype).itemsize
    total_bytes = rows * e * itemsize
    flat = encoder.reshape(rows, e)
    chunks = _chunk_rows(rows, e * itemsize)

    out = pl.pallas_call(
        _build_hbm_copy_kernel(chunks),
        out_shape=jax.ShapeDtypeStruct((rows, e), flat.dtype),
        in_specs=[pl.BlockSpec(memory_space=pl.ANY)],    # raw HBM ref, no auto-DMA
        out_specs=pl.BlockSpec(memory_space=pl.ANY),     # raw HBM ref, no auto-DMA
        scratch_shapes=[pltpu.SemaphoreType.DMA((len(chunks),))],
        cost_estimate=pl.CostEstimate(
            flops=0, transcendentals=0, bytes_accessed=2 * total_bytes),
    )(flat)

    return out.reshape(encoder.shape)


class ModelBaseRepProjection:
    """Mirror of the PyTorch module's interface."""

    def __init__(self, encoder_size: int):
        self.encoder_size = encoder_size
        self._build_model()

    def _build_model(self):
        pass  # base class builds no parameters

    def __call__(self, encoder):
        assert encoder.shape[-1] == self.encoder_size, (
            f"expected encoder_size={self.encoder_size}, got {encoder.shape[-1]}")
        return model_base_rep_projection_forward(encoder)


# -------------------------------------------------------------------- main ---

if __name__ == "__main__":
    key = jax.random.PRNGKey(0)

    # 1) Small, module-typical shape: [batch, l, encoder_size].
    batch, l, encoder_size = 2, 8, 128
    encoder = jax.random.normal(key, (batch, l, encoder_size), dtype=jnp.float32)
    model = ModelBaseRepProjection(encoder_size)
    out = model(encoder)
    jax.block_until_ready(out)
    assert out.shape == (batch, l, encoder_size)
    assert out.dtype == encoder.dtype
    assert jnp.array_equal(out, encoder), "identity-projection mismatch"

    # 2) Ragged row count (non-multiple-of-8), 2-D encoder.
    enc2 = jax.random.normal(key, (13, encoder_size), dtype=jnp.float32)
    out2 = model(enc2)
    jax.block_until_ready(out2)
    assert jnp.array_equal(out2, enc2), "ragged-row mismatch"

    # 3) Feature dim not a multiple of 128 + bf16 (DMA path is layout-agnostic).
    enc3 = jax.random.normal(key, (5, 7, 48), dtype=jnp.bfloat16)
    out3 = ModelBaseRepProjection(48)(enc3)
    jax.block_until_ready(out3)
    assert out3.dtype == jnp.bfloat16
    assert jnp.array_equal(out3, enc3), "non-lane-multiple mismatch"

    # 4) Larger input to exercise the multi-chunk (4 in-flight DMAs) path.
    enc4 = jax.random.normal(key, (4096, 1024), dtype=jnp.float32)  # 16 MiB
    out4 = ModelBaseRepProjection(1024)(enc4)
    jax.block_until_ready(out4)
    assert jnp.array_equal(out4, enc4), "multi-chunk DMA mismatch"

    print("KERNEL_OK")
</pallas_src>

<mosaic_0001>
module attributes {stable_mosaic.version = 11 : i64} {
  func.func @kernel(%arg0: memref<16x128xf32, #tpu.memory_space<any>>, %arg1: memref<16x128xf32, #tpu.memory_space<any>>, %arg2: memref<1x!tpu.dma_semaphore, #tpu.memory_space<semaphore_mem>>) attributes {dimension_semantics = [], scalar_prefetch = 0 : i64, scratch_operands = 1 : i64, tpu.core_type = #tpu.core_type<tc>} {
    %c0_i32 = arith.constant 0 : i32
    %0 = tpu.memref_slice %arg2[%c0_i32] : memref<1x!tpu.dma_semaphore, #tpu.memory_space<semaphore_mem>> -> memref<1x!tpu.dma_semaphore, #tpu.memory_space<semaphore_mem>>
    %1 = tpu.memref_squeeze %0 : memref<1x!tpu.dma_semaphore, #tpu.memory_space<semaphore_mem>> -> memref<!tpu.dma_semaphore, #tpu.memory_space<semaphore_mem>>
    tpu.enqueue_dma source(%arg0 : memref<16x128xf32, #tpu.memory_space<any>>) target(%arg1 : memref<16x128xf32, #tpu.memory_space<any>>) target_semaphore(%1 : memref<!tpu.dma_semaphore, #tpu.memory_space<semaphore_mem>>)
    %c0_i32_0 = arith.constant 0 : i32
    %2 = tpu.memref_slice %arg2[%c0_i32_0] : memref<1x!tpu.dma_semaphore, #tpu.memory_space<semaphore_mem>> -> memref<1x!tpu.dma_semaphore, #tpu.memory_space<semaphore_mem>>
    %3 = tpu.memref_squeeze %2 : memref<1x!tpu.dma_semaphore, #tpu.memory_space<semaphore_mem>> -> memref<!tpu.dma_semaphore, #tpu.memory_space<semaphore_mem>>
    tpu.wait_dma2 semaphore(%3 : memref<!tpu.dma_semaphore, #tpu.memory_space<semaphore_mem>>) src(%arg0 : memref<16x128xf32, #tpu.memory_space<any>>) dst(%arg1 : memref<16x128xf32, #tpu.memory_space<any>>)
    return
  }
}

</mosaic_0001>

<llo_original>
// kernel: model_base_rep_projection_forward.1
$region0: #{model_base_rep_projection_forward.1}
  #allocation0 [shape = 'u32[]', space=smem, size = 0x4, offset = 0x4, fixed_abs, tag = 'smem constant byte address 0x4 - core index']
  #allocation1 [shape = 'u32[144,128]{1,0:T(1,128)}', space=vmem, size = 0x12000, scoped, tag = 'internal scratch']
  #allocation2 [shape = 's32[1]{0}', space=sflag, size = 0x4, scoped, tag = 'scratch operand']
  #allocation3 [shape = 's32[]', space=sflag, size = 0x4, offset = 0, fixed_abs, tag = 'sflag constant byte address 0x0 - dummy sync flag']
  #allocation4 [shape = 'u32[0]{0}', space=smem, size = 0, offset = 0, fixed_abs, tag = 'smem constant byte address 0x0 - null']
  %s0 = inlined_call_operand.hbm [shape: f32[16,128], index: 0, kind: input, shape index: {}]
  %s1 = inlined_call_operand.hbm [shape: f32[16,128], index: 1, kind: output, shape index: {}]
  %s2 = sld [smem:[#allocation0]]
  $region2: #{model_base_rep_projection_forward.1} parent=0
    _
  %s4 = ssub.s32 1, %s2
  %s5 = scalar_select 0, %s4, %s2
  %s7 = sshll.u32 1, 14
  %s8 = sxor.u32 4294967295, %s7
  %s11 = sshll.u32 3, 24
  %s12 = sxor.u32 4294967295, %s11
  %s13 = sand.u32 0, %s12
  %s15 = sor.u32 %s13, 0
  %18 = dma.general %s0, 256, %s1, [#allocation2], [#allocation3], [#allocation4], %s15, 0
  %s19 = smul.u32 16, 1
  %s20 = sshll.u32 %s19, 4
  %21 = dma.done [#allocation2], %s20
  %22 = vsyncmov [#allocation2]
  %s23 = vpop.sfrf %22
  %p24 = scmp.eq.s32.totalorder %s23, 0
  %p25 = pneg %p24
  %27 = shalt.err (%p25)

</llo_original>
